<compile_context>
chip_gen: v7x
topology: tpu7x:2x2x1
jax: 0.10.0
libtpu: 0.0.40
codegen_flags: <defaults>
</compile_context>

<pallas_src>
import numpy as np
import jax
import jax.numpy as jnp
from jax.experimental import pallas as pl
from jax.experimental.pallas import tpu as pltpu


def make_positional_encoding(hidden_dim: int, max_len: int = 1000,
                             dtype=jnp.float32) -> jnp.ndarray:
    """Sinusoidal buffer, identical math to the PyTorch __init__.

    Built once in the activation dtype so the forward pass never pays an
    XLA slice+convert pass over the buffer (per performance review).
    """
    position = np.arange(0, max_len, dtype=np.float32)[:, None]            # [max_len, 1]
    div_term = np.exp(
        np.arange(0, hidden_dim, 2, dtype=np.float32) * -(np.log(10000.0) / hidden_dim)
    )                                                                       # [ceil(H/2)]
    pe = np.zeros((max_len, hidden_dim), dtype=np.float32)
    pe[:, 0::2] = np.sin(position * div_term)
    pe[:, 1::2] = np.cos(position * div_term)[:, : hidden_dim // 2]
    return jnp.asarray(pe[None, :, :], dtype=dtype)                         # [1, max_len, H]


def _add_pe_kernel(x_ref, pe_ref, o_ref):
    # x_ref: (tB, SUB, tM); pe_ref: (1, SUB, tM).  Pure VPU elementwise add with a
    # free major-axis broadcast over the batch dim; every vreg is fully occupied.
    o_ref[...] = x_ref[...] + pe_ref[...]


def _round_up(a: int, m: int) -> int:
    return ((a + m - 1) // m) * m


def _largest_divisor_leq(n: int, cap: int, search: int = 256) -> int:
    """Largest d <= cap with n % d == 0 (bounded search).

    Falls back to cap (ragged, Pallas-masked last block — correct for an
    elementwise op) if no nearby divisor exists.
    """
    cap = max(1, min(cap, n))
    for d in range(cap, max(0, cap - search), -1):
        if n % d == 0:
            return d
    return cap


def positional_encoding_forward(
    x: jnp.ndarray,
    pe: jnp.ndarray,
    *,
    block_budget_bytes: int = 4 * 1024 * 1024,
) -> jnp.ndarray:
    """x: [B, S, H]; pe: [1, max_len, H] -> x + pe[:, :S]  (eval-mode dropout = identity)."""
    B, S, H = x.shape
    N = S * H
    itemsize = jnp.dtype(x.dtype).itemsize
    # Full sublane depth for this dtype: 8 rows for f32, 16 for bf16, 32 for int8.
    sub = max(8, 8 * (4 // max(1, itemsize)))

    # pe is expected to already be in x.dtype (built that way at init); the guarded
    # cast below is a no-op in that case.  Flatten + slice is exact: row-major
    # (1, max_len, H) -> (1, max_len*H), first S*H entries == pe[:, :S, :] flattened.
    if pe.dtype != x.dtype:
        pe = pe.astype(x.dtype)   # TODO(synk): keep f32 + cast in-kernel if bit-closeness to torch matters
    pe_n = pe.reshape(1, -1)[:, :N]
    x2 = x.reshape(B, N)

    # Pad the flattened axis so the (SUB, M) view is fully (sublane, lane)-dense
    # (unmasked stores).  Typical transformer shapes (N % (sub*128) == 0) pad nothing.
    Np = _round_up(N, sub * 128)
    if Np != N:
        x2 = jnp.pad(x2, ((0, 0), (0, Np - N)))
        pe_n = jnp.pad(pe_n, ((0, 0), (0, Np - N)))
    M = Np // sub                      # multiple of 128
    K = M // 128                       # lane tiles available

    x3 = x2.reshape(B, sub, M)
    pe3 = pe_n.reshape(1, sub, M)

    # ---- tile selection -----------------------------------------------------
    row_bytes = sub * 128 * itemsize                       # one (1, sub, 128) slab
    # Batch tile: clamp so one x block can never exceed the budget even for huge B.
    tB = max(1, min(B, block_budget_bytes // row_bytes))
    tB = _largest_divisor_leq(B, tB)
    # Lane tile (in units of 128 lanes), preferring a divisor of K (dense last block).
    kmax = max(1, block_budget_bytes // (tB * row_bytes))
    k = _largest_divisor_leq(K, kmax)
    # v7x megacore: if everything collapsed into one block but the block is large,
    # split the lane axis so both TensorCores' HBM paths are used.
    if tB == B and k == K and K % 2 == 0 and tB * K * row_bytes > (1 << 20):
        k = K // 2
    tM = k * 128

    grid = (pl.cdiv(B, tB), pl.cdiv(M, tM))

    out3 = pl.pallas_call(
        _add_pe_kernel,
        out_shape=jax.ShapeDtypeStruct((B, sub, M), x.dtype),
        grid_spec=pltpu.PrefetchScalarGridSpec(
            num_scalar_prefetch=0,
            grid=grid,
            in_specs=[
                pl.BlockSpec((tB, sub, tM), lambda b, n: (b, 0, n)),   # x tile
                pl.BlockSpec((1, sub, tM), lambda b, n: (0, 0, n)),    # pe tile (bcast over B)
            ],
            out_specs=pl.BlockSpec((tB, sub, tM), lambda b, n: (b, 0, n)),
        ),
        compiler_params=pltpu.CompilerParams(
            dimension_semantics=("parallel", "parallel"),   # v7x: both TCs split the grid
            vmem_limit_bytes=48 * 1024 * 1024,              # fits v7x 64 MiB physical VMEM
        ),
        cost_estimate=pl.CostEstimate(
            flops=B * Np,
            transcendentals=0,
            bytes_accessed=(2 * B * Np + Np) * itemsize,
        ),
    )(x3, pe3)

    out2 = out3.reshape(B, Np)
    if Np != N:
        out2 = out2[:, :N]
    return out2.reshape(B, S, H)


if __name__ == "__main__":
    max_len = 1000
    dropout_rate = 0.1  # unused at inference (identity)

    # --- Case 1: module-sized toy shape (exercises the pad path, single block) ----
    B, S, H = 2, 8, 32
    x = jax.random.normal(jax.random.PRNGKey(0), (B, S, H), dtype=jnp.float32)
    pe = make_positional_encoding(H, max_len, dtype=x.dtype)
    out = jax.block_until_ready(positional_encoding_forward(x, pe))
    ref = x + pe[:, :S, :]
    assert out.shape == (B, S, H)
    np.testing.assert_allclose(np.asarray(out), np.asarray(ref), rtol=1e-6, atol=1e-6)

    # --- Case 2: aligned N, multi-tile lane grid (small budget forces grid=(1,4)) --
    B2, S2, H2 = 2, 64, 128
    x2 = jax.random.normal(jax.random.PRNGKey(1), (B2, S2, H2), dtype=jnp.float32)
    pe2 = make_positional_encoding(H2, max_len, dtype=x2.dtype)
    out2 = jax.block_until_ready(
        positional_encoding_forward(x2, pe2, block_budget_bytes=16 * 1024))
    ref2 = x2 + pe2[:, :S2, :]
    np.testing.assert_allclose(np.asarray(out2), np.asarray(ref2), rtol=1e-6, atol=1e-6)

    # --- Case 3: batch tiling exercised (grid=(2,2)) -------------------------------
    B3, S3, H3 = 4, 16, 128
    x3 = jax.random.normal(jax.random.PRNGKey(2), (B3, S3, H3), dtype=jnp.float32)
    pe3 = make_positional_encoding(H3, max_len, dtype=x3.dtype)
    out3 = jax.block_until_ready(
        positional_encoding_forward(x3, pe3, block_budget_bytes=8 * 1024))
    ref3 = x3 + pe3[:, :S3, :]
    np.testing.assert_allclose(np.asarray(out3), np.asarray(ref3), rtol=1e-6, atol=1e-6)

    print("KERNEL_OK")
</pallas_src>

<mosaic_0001>
module attributes {stable_mosaic.version = 11 : i64} {
  func.func @_add_pe_kernel(%arg0: i32, %arg1: i32, %arg2: memref<2x8x128xf32, #tpu.memory_space<vmem>>, %arg3: memref<1x8x128xf32, #tpu.memory_space<vmem>>, %arg4: memref<2x8x128xf32, #tpu.memory_space<vmem>>) attributes {dimension_semantics = [#tpu.dimension_semantics<parallel>, #tpu.dimension_semantics<parallel>], iteration_bounds = array<i64: 1, 1>, scalar_prefetch = 0 : i64, scratch_operands = 0 : i64, tpu.core_type = #tpu.core_type<tc>, window_params = [{transform_indices = @transform_0, window_bounds = array<i64: 2, 8, 128>}, {transform_indices = @transform_1, window_bounds = array<i64: 1, 8, 128>}, {transform_indices = @transform_2, window_bounds = array<i64: 2, 8, 128>}]} {
    %c0 = arith.constant 0 : index
    %c0_0 = arith.constant 0 : index
    %c0_1 = arith.constant 0 : index
    %0 = vector.load %arg2[%c0, %c0_0, %c0_1] : memref<2x8x128xf32, #tpu.memory_space<vmem>>, vector<2x8x128xf32>
    %c0_2 = arith.constant 0 : index
    %c0_3 = arith.constant 0 : index
    %c0_4 = arith.constant 0 : index
    %1 = vector.load %arg3[%c0_2, %c0_3, %c0_4] : memref<1x8x128xf32, #tpu.memory_space<vmem>>, vector<1x8x128xf32>
    %2 = vector.broadcast %1 : vector<1x8x128xf32> to vector<2x8x128xf32>
    %3 = arith.addf %0, %2 : vector<2x8x128xf32>
    %c0_5 = arith.constant 0 : index
    %c0_6 = arith.constant 0 : index
    %c0_7 = arith.constant 0 : index
    %4 = vector.load %arg4[%c0_5, %c0_6, %c0_7] : memref<2x8x128xf32, #tpu.memory_space<vmem>>, vector<2x8x128xf32>
    tpu.vector_store %arg4[%c0_5, %c0_6, %c0_7], %3 {strides = array<i32>} : memref<2x8x128xf32, #tpu.memory_space<vmem>>, vector<2x8x128xf32>,
    return
  }
  func.func @transform_0(%arg0: i32, %arg1: i32) -> (i32, i32, i32) {
    %c0_i32 = arith.constant 0 : i32
    %c0_i32_0 = arith.constant 0 : i32
    return %arg0, %c0_i32, %arg1 : i32, i32, i32
  }
  func.func @transform_1(%arg0: i32, %arg1: i32) -> (i32, i32, i32) {
    %c0_i32 = arith.constant 0 : i32
    %c0_i32_0 = arith.constant 0 : i32
    %c0_i32_1 = arith.constant 0 : i32
    return %c0_i32, %c0_i32_0, %arg1 : i32, i32, i32
  }
  func.func @transform_2(%arg0: i32, %arg1: i32) -> (i32, i32, i32) {
    %c0_i32 = arith.constant 0 : i32
    %c0_i32_0 = arith.constant 0 : i32
    return %arg0, %c0_i32, %arg1 : i32, i32, i32
  }
}

</mosaic_0001>

<llo_original>
// kernel: tpu_custom_call.1
$region0: #{tpu_custom_call.1}
  #allocation0 [shape = 'u32[]', space=smem, size = 0x4, offset = 0x4, fixed_abs, tag = 'smem constant byte address 0x4 - core index']
  #allocation1 [shape = 'u32[144,128]{1,0:T(1,128)}', space=vmem, size = 0x12000, scoped, tag = 'internal scratch']
  %s0 = inlined_call_operand.hbm [shape: f32[2,8,128], index: 0, kind: input, shape index: {}]
  %s1 = inlined_call_operand.hbm [shape: f32[1,8,128], index: 1, kind: input, shape index: {}]
  %s2 = inlined_call_operand.hbm [shape: f32[2,8,128], index: 2, kind: output, shape index: {}]
  %s3 = sld [smem:[#allocation0]]
  $region26: #{tpu_custom_call.1} parent=0
    _
  %s5 = ssub.s32 1, %s3
  %s6 = scalar_select 0, %s5, %s3
  $region1: #{tpu_custom_call.1} parent=0
    #allocation2 [shape = 'u8[8192]{0}', space=vmem, size = 0x2000, scoped, tag = 'input window, operand 0, single buffered']
    #allocation3 [shape = 's32[1]{0}', space=sflag, size = 0x4, scoped, tag = 'scoped memory for tpu_custom_call.1']
    #allocation4 [shape = 's32[1]{0}', space=sflag, size = 0x4, scoped, tag = 'scoped memory for tpu_custom_call.1']
    #allocation5 [shape = 'u8[4096]{0}', space=vmem, size = 0x1000, scoped, tag = 'input window, operand 1, single buffered']
    #allocation6 [shape = 's32[1]{0}', space=sflag, size = 0x4, scoped, tag = 'scoped memory for tpu_custom_call.1']
    #allocation7 [shape = 'u8[8192]{0}', space=vmem, size = 0x2000, scoped, tag = 'output window, operand 0, single buffered']
    %7 = vsyncpa [#allocation3], 0
    %8 = vsyncpa [#allocation6], 0
    %9 = vsyncpa [#allocation4], 0
    // Predicated region
    $region2: #{tpu_custom_call.1} parent=1 // pred_check
      _
    $region3: #{tpu_custom_call.1} parent=1 // pred_check_branch
      %11 = sbr.rel (0) target = $region5
    $region4: #{tpu_custom_call.1} parent=1 // pred_region
      %s13 = ssub.s32 256, 256
      %14 = vsyncadd [#allocation3], %s13
      %s15 = sshll.u32 [#allocation2], 4
      %s16 = int_to_ptr.vmem [resolvable:$true] %s15
      %21 = dma.hbm_to_vmem [thread:$0]  %s0, 256, %s16, [#allocation3], 128, 128, 8
    $region5: #{tpu_custom_call.1} parent=1 // pred_fallthru
      _
    // Predicated region
    $region6: #{tpu_custom_call.1} parent=1 // pred_check
      _
    $region7: #{tpu_custom_call.1} parent=1 // pred_check_branch
      %23 = sbr.rel (0) target = $region9
    $region8: #{tpu_custom_call.1} parent=1 // pred_region
      %s25 = ssub.s32 128, 128
      %26 = vsyncadd [#allocation6], %s25
      %s28 = sshll.u32 [#allocation5], 4
      %s29 = int_to_ptr.vmem [resolvable:$true] %s28
      %31 = dma.hbm_to_vmem [thread:$0]  %s1, 128, %s29, [#allocation6]
    $region9: #{tpu_custom_call.1} parent=1 // pred_fallthru
      _
    // Predicated region
    $region10: #{tpu_custom_call.1} parent=1 // pred_check
      _
    $region11: #{tpu_custom_call.1} parent=1 // pred_check_branch
      %33 = sbr.rel (0) target = $region13
    $region12: #{tpu_custom_call.1} parent=1 // pred_region
      %34 = dma.done [#allocation3], 256
    $region13: #{tpu_custom_call.1} parent=1 // pred_fallthru
      _
    // Predicated region
    $region14: #{tpu_custom_call.1} parent=1 // pred_check
      _
    $region15: #{tpu_custom_call.1} parent=1 // pred_check_branch
      %36 = sbr.rel (0) target = $region17
    $region16: #{tpu_custom_call.1} parent=1 // pred_region
      %37 = dma.done [#allocation6], 128
    $region17: #{tpu_custom_call.1} parent=1 // pred_fallthru
      _
    %v38 = vld [vmem:[#allocation2] sm:$0xff]
    %v39 = vld [vmem:[#allocation2 + $0x8] sm:$0xff]
    %v40 = vld [vmem:[#allocation5] sm:$0xff]
    %v41 = vadd.f32 %v38, %v40
    %v42 = vadd.f32 %v39, %v40
    %43 = vst [vmem:[#allocation7] sm:$0xff] %v41
    %44 = vst [vmem:[#allocation7 + $0x8] sm:$0xff] %v42
    // Predicated region
    $region18: #{tpu_custom_call.1} parent=1 // pred_check
      _
    $region19: #{tpu_custom_call.1} parent=1 // pred_check_branch
      %46 = sbr.rel (0) target = $region21
    $region20: #{tpu_custom_call.1} parent=1 // pred_region
      %s48 = ssub.s32 256, 256
      %49 = vsyncadd [#allocation4], %s48
      %s50 = sshll.u32 [#allocation7], 4
      %s51 = int_to_ptr.vmem [resolvable:$true] %s50
      %56 = dma.vmem_to_hbm [thread:$0]  %s51, 256, %s2, [#allocation4], 128, 128, 8
    $region21: #{tpu_custom_call.1} parent=1 // pred_fallthru
      _
    // Predicated region
    $region22: #{tpu_custom_call.1} parent=1 // pred_check
      _
    $region23: #{tpu_custom_call.1} parent=1 // pred_check_branch
      %58 = sbr.rel (0) target = $region25
    $region24: #{tpu_custom_call.1} parent=1 // pred_region
      %59 = dma.done [#allocation4], 256
    $region25: #{tpu_custom_call.1} parent=1 // pred_fallthru
      _
    %60 = vsyncpa [#allocation3], 1
    %61 = vsyncpa [#allocation6], 1
    %62 = vsyncpa [#allocation4], 1

</llo_original>
